<compile_context>
chip_gen: v5e
topology: v5e:2x2
jax: 0.10.0
libtpu: 0.0.40
codegen_flags: <defaults>
</compile_context>

<pallas_src>
import functools

import jax
import jax.numpy as jnp
from jax.experimental import pallas as pl
from jax.experimental.pallas import tpu as pltpu


def _fusion_kernel(batch_ref, z_ref, u_ref, w_ref, b_ref, out_ref, glob_ref, *,
                   n_total, tn, b_pad, needs_mask):
    """One node-tile step of the segment-sum readout (+ one-shot global projection).

    grid = (n_tiles,); out_ref is the resident [B_pad, D] f32 segment-sum accumulator,
    glob_ref the resident [B_pad, glob_dout] relu(u@W+b) block (written once at step 0).
    """
    n_idx = pl.program_id(0)
    n_last = pl.num_programs(0) - 1

    @pl.when(n_idx == 0)
    def _init():
        out_ref[...] = jnp.zeros_like(out_ref)
        # Global projection + ReLU: tiny, executed exactly once, hidden under the z stream.
        acc = jnp.dot(u_ref[...].astype(jnp.float32), w_ref[...].astype(jnp.float32),
                      preferred_element_type=jnp.float32)
        glob_ref[...] = jnp.maximum(acc + b_ref[...].astype(jnp.float32), 0.0)

    # One-hot segment matrix for this node tile: mask[g, k] = (batch[k] == g).
    bid = batch_ref[...]                                                # [1, tn] int32
    graph_ids = jax.lax.broadcasted_iota(jnp.int32, (b_pad, tn), 0)     # [B_pad, tn]
    mask = graph_ids == bid

    def _accumulate(seg_mask, z_tile):
        # Segment sum on the MXU.  bf16 z stays bf16 end-to-end (0/1 one-hot is exact in
        # bf16) so the MXU takes it natively and HBM/VMEM traffic stays halved.
        if z_tile.dtype == jnp.bfloat16:
            onehot = seg_mask.astype(jnp.bfloat16)
        else:
            onehot = seg_mask.astype(jnp.float32)
            z_tile = z_tile.astype(jnp.float32)
        out_ref[...] += jnp.dot(onehot, z_tile, preferred_element_type=jnp.float32)

    if needs_mask:
        # Only the LAST node tile is partial.  Gate the masking work behind pl.when so the
        # full tiles on the streaming critical path never pay the full-tile select.
        @pl.when(n_idx < n_last)
        def _full_tile():
            _accumulate(mask, z_ref[...])

        @pl.when(n_idx == n_last)
        def _partial_tile():
            # Knock out out-of-bounds columns in the one-hot (garbage batch ids) AND zero the
            # out-of-bounds z rows (garbage / NaN bit patterns would poison 0*NaN in the MXU).
            node_pos = n_idx * tn + jax.lax.broadcasted_iota(jnp.int32, (b_pad, tn), 1)
            seg_mask = mask & (node_pos < n_total)
            row_valid = (n_idx * tn
                         + jax.lax.broadcasted_iota(jnp.int32, (tn, 1), 0)) < n_total
            z_tile = jnp.where(row_valid, z_ref[...], jnp.zeros((), z_ref.dtype))
            _accumulate(seg_mask, z_tile)
    else:
        _accumulate(mask, z_ref[...])


def _round_up(x, m):
    return ((x + m - 1) // m) * m


def graph_global_fusion(z, u, batch, batch_size, w, b, *, node_tile=None):
    """Pallas forward of GraphGlobalFusion (mean readout).

    z: [N, D], u: [B, glob_din], batch: [N] int32, w: [glob_din, glob_dout], b: [glob_dout].
    Returns [B, D + glob_dout] float32.
    """
    N, D = z.shape
    B = int(batch_size)
    glob_din, glob_dout = w.shape
    assert u.shape == (B, glob_din)
    assert batch.shape == (N,)

    # Sublane-pad the graph axis: 16 rows for a bf16 one-hot operand, 8 for f32.
    sublane = 16 if z.dtype == jnp.bfloat16 else 8
    b_pad = _round_up(max(B, 1), sublane)

    # Node tile: streamed / double-buffered along the (single) reduction axis.  Target 2048
    # rows per tile, shrunk so the pipeline fits a conservative VMEM budget (v7x: 64 MiB/TC).
    itemsize = z.dtype.itemsize
    if node_tile is None:
        budget = 44 * 1024 * 1024
        fixed = b_pad * D * 4 + b_pad * (glob_din + glob_dout) * 8 + (1 << 20)
        per_row = 2 * D * itemsize + 2 * 4          # double-buffered z tile + batch-id tile
        cap = max(128, ((budget - fixed) // per_row) // 128 * 128)
        node_tile = min(2048, cap)
    if N <= node_tile:
        node_tile = N
    tn = node_tile
    assert tn == N or tn % 128 == 0, "node_tile must equal N or be a multiple of 128"
    n_tiles = pl.cdiv(N, tn)
    needs_mask = (N % tn) != 0

    batch2d = batch.astype(jnp.int32).reshape(1, N)
    u_pad = jnp.zeros((b_pad, glob_din), u.dtype).at[:B].set(u)
    b2d = b.reshape(1, glob_dout)

    kernel = functools.partial(_fusion_kernel, n_total=N, tn=tn, b_pad=b_pad,
                               needs_mask=needs_mask)

    graph_sum_pad, glob_pad = pl.pallas_call(
        kernel,
        out_shape=(jax.ShapeDtypeStruct((b_pad, D), jnp.float32),
                   jax.ShapeDtypeStruct((b_pad, glob_dout), jnp.float32)),
        grid=(n_tiles,),
        in_specs=[
            pl.BlockSpec((1, tn), lambda n: (0, n)),                 # batch ids stream with N
            pl.BlockSpec((tn, D), lambda n: (n, 0)),                 # z tile (full width)
            pl.BlockSpec((b_pad, glob_din), lambda n: (0, 0)),       # resident small inputs
            pl.BlockSpec((glob_din, glob_dout), lambda n: (0, 0)),
            pl.BlockSpec((1, glob_dout), lambda n: (0, 0)),
        ],
        out_specs=(
            pl.BlockSpec((b_pad, D), lambda n: (0, 0)),              # resident accumulator
            pl.BlockSpec((b_pad, glob_dout), lambda n: (0, 0)),      # relu(u@W+b)
        ),
        compiler_params=pltpu.CompilerParams(
            dimension_semantics=("arbitrary",),
            vmem_limit_bytes=48 * 1024 * 1024,
        ),
    )(batch2d, z, u_pad, w, b2d)

    # Per-graph counts hoisted out of the kernel (tiny) + exact mean divide in the wrapper.
    counts = jax.ops.segment_sum(jnp.ones((N,), jnp.float32), batch, num_segments=B)
    graph_emb = graph_sum_pad[:B] / jnp.maximum(counts, 1.0)[:, None]

    # Concatenate the two lane-aligned slabs in the wrapper; slice off graph-axis padding.
    return jnp.concatenate([graph_emb, glob_pad[:B]], axis=-1)


def _reference(z, u, batch, batch_size, w, b):
    seg_sum = jax.ops.segment_sum(z.astype(jnp.float32), batch, num_segments=batch_size)
    counts = jax.ops.segment_sum(jnp.ones((z.shape[0],), jnp.float32), batch,
                                 num_segments=batch_size)
    graph_emb = seg_sum / jnp.maximum(counts, 1.0)[:, None]
    glob = jax.nn.relu(u.astype(jnp.float32) @ w + b)
    return jnp.concatenate([graph_emb, glob], axis=-1)


def _check(key, N, D, B, glob_din, glob_dout, node_tile=None, dtype=jnp.float32,
           atol=1e-4, rtol=1e-4):
    k_z, k_u, k_w, k_b, k_bt = jax.random.split(key, 5)
    z = jax.random.normal(k_z, (N, D), dtype=jnp.float32).astype(dtype)
    u = jax.random.normal(k_u, (B, glob_din), dtype=jnp.float32)
    batch = jax.random.randint(k_bt, (N,), 0, B, dtype=jnp.int32)
    w = jax.random.normal(k_w, (glob_din, glob_dout), jnp.float32) / (glob_din ** 0.5)
    bias = jax.random.normal(k_b, (glob_dout,), jnp.float32) * 0.01

    out = graph_global_fusion(z, u, batch, B, w, bias, node_tile=node_tile)
    out = jax.block_until_ready(out)
    ref = _reference(z, u, batch, B, w, bias)
    assert out.shape == (B, D + glob_dout)
    err = jnp.max(jnp.abs(out - ref))
    assert jnp.allclose(out, ref, atol=atol, rtol=rtol), \
        f"mismatch vs reference (max abs err {err})"


if __name__ == "__main__":
    key = jax.random.PRNGKey(0)
    k1, k2, k3 = jax.random.split(key, 3)

    # Small, module-consistent shapes (single-tile fast path).
    _check(k1, N=16, D=32, B=2, glob_din=16, glob_dout=32)

    # Multi-tile path: 3 node tiles (last partial -> masked branch under pl.when).
    _check(k2, N=300, D=640, B=3, glob_din=16, glob_dout=32, node_tile=128)

    # bf16 node features streamed natively (one-hot built in bf16, f32 accumulation).
    _check(k3, N=300, D=256, B=4, glob_din=16, glob_dout=32, node_tile=128,
           dtype=jnp.bfloat16, atol=2e-3, rtol=2e-3)

    print("KERNEL_OK")
</pallas_src>

<mosaic_0001>
module attributes {stable_mosaic.version = 11 : i64} {
  func.func @_fusion_kernel(%arg0: i32, %arg1: memref<1x16xi32, #tpu.memory_space<vmem>>, %arg2: memref<16x32xf32, #tpu.memory_space<vmem>>, %arg3: memref<8x16xf32, #tpu.memory_space<vmem>>, %arg4: memref<16x32xf32, #tpu.memory_space<vmem>>, %arg5: memref<1x32xf32, #tpu.memory_space<vmem>>, %arg6: memref<8x32xf32, #tpu.memory_space<vmem>>, %arg7: memref<8x32xf32, #tpu.memory_space<vmem>>) attributes {dimension_semantics = [#tpu.dimension_semantics<arbitrary>], iteration_bounds = array<i64: 1>, scalar_prefetch = 0 : i64, scratch_operands = 0 : i64, tpu.core_type = #tpu.core_type<tc>, window_params = [{transform_indices = @transform_0, window_bounds = array<i64: 1, 16>}, {transform_indices = @transform_1, window_bounds = array<i64: 16, 32>}, {pipeline_mode = #tpu.pipeline_mode<synchronous>, transform_indices = @transform_2, window_bounds = array<i64: 8, 16>}, {pipeline_mode = #tpu.pipeline_mode<synchronous>, transform_indices = @transform_3, window_bounds = array<i64: 16, 32>}, {pipeline_mode = #tpu.pipeline_mode<synchronous>, transform_indices = @transform_4, window_bounds = array<i64: 1, 32>}, {pipeline_mode = #tpu.pipeline_mode<synchronous>, transform_indices = @transform_5, window_bounds = array<i64: 8, 32>}, {pipeline_mode = #tpu.pipeline_mode<synchronous>, transform_indices = @transform_6, window_bounds = array<i64: 8, 32>}]} {
    %c0_i32 = arith.constant 0 : i32
    %0 = arith.cmpi eq, %arg0, %c0_i32 : i32
    %1 = arith.extui %0 : i1 to i32
    %c0_i32_0 = arith.constant 0 : i32
    %2 = arith.cmpi ne, %1, %c0_i32_0 : i32
    scf.if %2 {
      %cst_8 = arith.constant 0.000000e+00 : f32
      %14 = vector.broadcast %cst_8 : f32 to vector<8x32xf32>
      %c0_9 = arith.constant 0 : index
      %c0_10 = arith.constant 0 : index
      %15 = vector.load %arg6[%c0_9, %c0_10] : memref<8x32xf32, #tpu.memory_space<vmem>>, vector<8x32xf32>
      tpu.vector_store %arg6[%c0_9, %c0_10], %14 {strides = array<i32>} : memref<8x32xf32, #tpu.memory_space<vmem>>, vector<8x32xf32>,
      %c0_11 = arith.constant 0 : index
      %c0_12 = arith.constant 0 : index
      %16 = vector.load %arg3[%c0_11, %c0_12] : memref<8x16xf32, #tpu.memory_space<vmem>>, vector<8x16xf32>
      %c0_13 = arith.constant 0 : index
      %c0_14 = arith.constant 0 : index
      %17 = vector.load %arg4[%c0_13, %c0_14] : memref<16x32xf32, #tpu.memory_space<vmem>>, vector<16x32xf32>
      %cst_15 = arith.constant dense<0.000000e+00> : vector<8x32xf32>
      %18 = tpu.matmul %16, %17, %cst_15 {dimension_numbers = #tpu.dot_dimension_numbers<[1], [0], [0], [1], [0, 0, 1, 1], [], []>} : vector<8x16xf32>, vector<16x32xf32>, vector<8x32xf32> -> vector<8x32xf32>
      %c0_16 = arith.constant 0 : index
      %c0_17 = arith.constant 0 : index
      %19 = vector.load %arg5[%c0_16, %c0_17] : memref<1x32xf32, #tpu.memory_space<vmem>>, vector<1x32xf32>
      %20 = vector.broadcast %19 : vector<1x32xf32> to vector<8x32xf32>
      %21 = arith.addf %18, %20 : vector<8x32xf32>
      %cst_18 = arith.constant 0.000000e+00 : f32
      %22 = vector.broadcast %cst_18 : f32 to vector<8x32xf32>
      %23 = arith.maximumf %21, %22 : vector<8x32xf32>
      %c0_19 = arith.constant 0 : index
      %c0_20 = arith.constant 0 : index
      %24 = vector.load %arg7[%c0_19, %c0_20] : memref<8x32xf32, #tpu.memory_space<vmem>>, vector<8x32xf32>
      tpu.vector_store %arg7[%c0_19, %c0_20], %23 {strides = array<i32>} : memref<8x32xf32, #tpu.memory_space<vmem>>, vector<8x32xf32>,
    } else {
    }
    %c0 = arith.constant 0 : index
    %c0_1 = arith.constant 0 : index
    %3 = vector.load %arg1[%c0, %c0_1] : memref<1x16xi32, #tpu.memory_space<vmem>>, vector<1x16xi32>
    %4 = tpu.iota {dimensions = array<i32: 0>} : vector<8x16xi32>
    %5 = vector.broadcast %3 : vector<1x16xi32> to vector<8x16xi32>
    %6 = arith.cmpi eq, %4, %5 : vector<8x16xi32>
    %c0_2 = arith.constant 0 : index
    %c0_3 = arith.constant 0 : index
    %7 = vector.load %arg2[%c0_2, %c0_3] : memref<16x32xf32, #tpu.memory_space<vmem>>, vector<16x32xf32>
    %8 = arith.extui %6 : vector<8x16xi1> to vector<8x16xi32>
    %9 = arith.sitofp %8 : vector<8x16xi32> to vector<8x16xf32>
    %c0_4 = arith.constant 0 : index
    %c0_5 = arith.constant 0 : index
    %10 = vector.load %arg6[%c0_4, %c0_5] : memref<8x32xf32, #tpu.memory_space<vmem>>, vector<8x32xf32>
    %cst = arith.constant dense<0.000000e+00> : vector<8x32xf32>
    %11 = tpu.matmul %9, %7, %cst {dimension_numbers = #tpu.dot_dimension_numbers<[1], [0], [0], [1], [0, 0, 1, 1], [], []>} : vector<8x16xf32>, vector<16x32xf32>, vector<8x32xf32> -> vector<8x32xf32>
    %12 = arith.addf %10, %11 : vector<8x32xf32>
    %c0_6 = arith.constant 0 : index
    %c0_7 = arith.constant 0 : index
    %13 = vector.load %arg6[%c0_6, %c0_7] : memref<8x32xf32, #tpu.memory_space<vmem>>, vector<8x32xf32>
    tpu.vector_store %arg6[%c0_6, %c0_7], %12 {strides = array<i32>} : memref<8x32xf32, #tpu.memory_space<vmem>>, vector<8x32xf32>,
    return
  }
  func.func @transform_0(%arg0: i32) -> (i32, i32) {
    %c0_i32 = arith.constant 0 : i32
    %c0_i32_0 = arith.constant 0 : i32
    return %c0_i32, %arg0 : i32, i32
  }
  func.func @transform_1(%arg0: i32) -> (i32, i32) {
    %c0_i32 = arith.constant 0 : i32
    %c0_i32_0 = arith.constant 0 : i32
    return %arg0, %c0_i32 : i32, i32
  }
  func.func @transform_2(%arg0: i32) -> (i32, i32) {
    %c0_i32 = arith.constant 0 : i32
    %c0_i32_0 = arith.constant 0 : i32
    %c0_i32_1 = arith.constant 0 : i32
    return %c0_i32, %c0_i32_0 : i32, i32
  }
  func.func @transform_3(%arg0: i32) -> (i32, i32) {
    %c0_i32 = arith.constant 0 : i32
    %c0_i32_0 = arith.constant 0 : i32
    %c0_i32_1 = arith.constant 0 : i32
    return %c0_i32, %c0_i32_0 : i32, i32
  }
  func.func @transform_4(%arg0: i32) -> (i32, i32) {
    %c0_i32 = arith.constant 0 : i32
    %c0_i32_0 = arith.constant 0 : i32
    %c0_i32_1 = arith.constant 0 : i32
    return %c0_i32, %c0_i32_0 : i32, i32
  }
  func.func @transform_5(%arg0: i32) -> (i32, i32) {
    %c0_i32 = arith.constant 0 : i32
    %c0_i32_0 = arith.constant 0 : i32
    %c0_i32_1 = arith.constant 0 : i32
    return %c0_i32, %c0_i32_0 : i32, i32
  }
  func.func @transform_6(%arg0: i32) -> (i32, i32) {
    %c0_i32 = arith.constant 0 : i32
    %c0_i32_0 = arith.constant 0 : i32
    %c0_i32_1 = arith.constant 0 : i32
    return %c0_i32, %c0_i32_0 : i32, i32
  }
}

</mosaic_0001>

<llo_original>
// kernel: tpu_custom_call.1
$region0: #{tpu_custom_call.1}
  #allocation0 [shape = 'u32[]', space=smem, size = 0x4, offset = 0x4, fixed_abs, tag = 'smem constant byte address 0x4 - core index']
  #allocation1 [shape = 'u32[72,128]{1,0:T(1,128)}', space=vmem, size = 0x9000, scoped, tag = 'internal scratch']
  %s0 = inlined_call_operand.hbm [shape: s32[1,16], index: 0, kind: input, shape index: {}]
  %s1 = inlined_call_operand.hbm [shape: f32[16,32], index: 1, kind: input, shape index: {}]
  %s2 = inlined_call_operand.hbm [shape: f32[8,16], index: 2, kind: input, shape index: {}]
  %s3 = inlined_call_operand.hbm [shape: f32[16,32], index: 3, kind: input, shape index: {}]
  %s4 = inlined_call_operand.vmem [shape: f32[1,32], index: 4, kind: input, shape index: {}]
  %s5 = inlined_call_operand.hbm [shape: f32[8,32], index: 5, kind: output, shape index: {0}]
  %s6 = inlined_call_operand.hbm [shape: f32[8,32], index: 6, kind: output, shape index: {1}]
  %7 = xla_tuple %s5, %s6
  %s8 = sld [smem:[#allocation0]]
  $region58: #{tpu_custom_call.1} parent=0
    _
  %s10 = ssub.s32 1, %s8
  %s11 = scalar_select 0, %s10, %s8
  $region1: #{tpu_custom_call.1} parent=0
    #allocation2 [shape = 'u8[512]{0}', space=vmem, size = 0x400, scoped, tag = 'input window, operand 0, single buffered']
    #allocation3 [shape = 's32[1]{0}', space=sflag, size = 0x4, scoped, tag = 'scoped memory for tpu_custom_call.1']
    #allocation4 [shape = 's32[1]{0}', space=sflag, size = 0x4, scoped, tag = 'scoped memory for tpu_custom_call.1']
    #allocation5 [shape = 'u8[8192]{0}', space=vmem, size = 0x2000, scoped, tag = 'input window, operand 1, single buffered']
    #allocation6 [shape = 's32[1]{0}', space=sflag, size = 0x4, scoped, tag = 'scoped memory for tpu_custom_call.1']
    #allocation7 [shape = 'u8[4096]{0}', space=vmem, size = 0x1000, scoped, tag = 'input window, operand 2, single buffered']
    #allocation8 [shape = 'u8[8192]{0}', space=vmem, size = 0x2000, scoped, tag = 'input window, operand 3, single buffered']
    #allocation9 [shape = 's32[1]{0}', space=sflag, size = 0x4, scoped, tag = 'scoped memory for tpu_custom_call.1']
    #allocation10 [shape = 'u8[4096]{0}', space=vmem, size = 0x1000, scoped, tag = 'output window, operand 0, single buffered']
    #allocation11 [shape = 'u8[4096]{0}', space=vmem, size = 0x1000, scoped, tag = 'output window, operand 1, single buffered']
    #allocation12 [shape = 's32[1]{0}', space=sflag, size = 0x4, scoped, tag = 'scoped memory for tpu_custom_call.1']
    %12 = vsyncpa [#allocation3], 0
    %13 = vsyncpa [#allocation6], 0
    %14 = vsyncpa [#allocation9], 0
    %15 = vsyncpa [#allocation4], 0
    %16 = vsyncpa [#allocation12], 0
    // Predicated region
    $region2: #{tpu_custom_call.1} parent=1 // pred_check
      _
    $region3: #{tpu_custom_call.1} parent=1 // pred_check_branch
      %18 = sbr.rel (0) target = $region5
    $region4: #{tpu_custom_call.1} parent=1 // pred_region
      %20 = vsyncadd [#allocation3], 0
      %s22 = sshll.u32 %s0, 4
      %s23 = int_to_ptr.hbm [resolvable:$true] %s22
      %s24 = sshll.u32 [#allocation2], 4
      %s25 = int_to_ptr.vmem [resolvable:$true] %s24
      %27 = dma.hbm_to_vmem [thread:$0]  %s23, 16, %s25, [#allocation3]
    $region5: #{tpu_custom_call.1} parent=1 // pred_fallthru
      _
    // Predicated region
    $region6: #{tpu_custom_call.1} parent=1 // pred_check
      _
    $region7: #{tpu_custom_call.1} parent=1 // pred_check_branch
      %29 = sbr.rel (0) target = $region9
    $region8: #{tpu_custom_call.1} parent=1 // pred_region
      %31 = vsyncadd [#allocation6], 0
      %s32 = sshll.u32 %s1, 4
      %s33 = int_to_ptr.hbm [resolvable:$true] %s32
      %s34 = sshll.u32 [#allocation5], 4
      %s35 = int_to_ptr.vmem [resolvable:$true] %s34
      %40 = dma.hbm_to_vmem [thread:$0]  %s33, 256, %s35, [#allocation6], 128, 128, 8
    $region9: #{tpu_custom_call.1} parent=1 // pred_fallthru
      _
    // Predicated region
    $region10: #{tpu_custom_call.1} parent=1 // pred_check
      _
    $region11: #{tpu_custom_call.1} parent=1 // pred_check_branch
      %42 = sbr.rel (0) target = $region13
    $region12: #{tpu_custom_call.1} parent=1 // pred_region
      %44 = vsyncadd [#allocation6], 0
      %s46 = sshll.u32 %s2, 4
      %s47 = int_to_ptr.hbm [resolvable:$true] %s46
      %s48 = sshll.u32 [#allocation7], 4
      %s49 = int_to_ptr.vmem [resolvable:$true] %s48
      %51 = dma.hbm_to_vmem [thread:$0]  %s47, 128, %s49, [#allocation6]
    $region13: #{tpu_custom_call.1} parent=1 // pred_fallthru
      _
    // Predicated region
    $region14: #{tpu_custom_call.1} parent=1 // pred_check
      _
    $region15: #{tpu_custom_call.1} parent=1 // pred_check_branch
      %53 = sbr.rel (0) target = $region17
    $region16: #{tpu_custom_call.1} parent=1 // pred_region
      %55 = vsyncadd [#allocation9], 0
      %s56 = sshll.u32 %s3, 4
      %s57 = int_to_ptr.hbm [resolvable:$true] %s56
      %s58 = sshll.u32 [#allocation8], 4
      %s59 = int_to_ptr.vmem [resolvable:$true] %s58
      %64 = dma.hbm_to_vmem [thread:$0]  %s57, 256, %s59, [#allocation9], 128, 128, 8
    $region17: #{tpu_custom_call.1} parent=1 // pred_fallthru
      _
    // Predicated region
    $region18: #{tpu_custom_call.1} parent=1 // pred_check
      _
    $region19: #{tpu_custom_call.1} parent=1 // pred_check_branch
      %66 = sbr.rel (0) target = $region21
    $region20: #{tpu_custom_call.1} parent=1 // pred_region
      _
    $region21: #{tpu_custom_call.1} parent=1 // pred_fallthru
      _
    // Predicated region
    $region22: #{tpu_custom_call.1} parent=1 // pred_check
      _
    $region23: #{tpu_custom_call.1} parent=1 // pred_check_branch
      %68 = sbr.rel (0) target = $region25
    $region24: #{tpu_custom_call.1} parent=1 // pred_region
      %70 = dma.done [#allocation3], 16
    $region25: #{tpu_custom_call.1} parent=1 // pred_fallthru
      _
    // Predicated region
    $region26: #{tpu_custom_call.1} parent=1 // pred_check
      _
    $region27: #{tpu_custom_call.1} parent=1 // pred_check_branch
      %72 = sbr.rel (0) target = $region29
    $region28: #{tpu_custom_call.1} parent=1 // pred_region
      %74 = dma.done [#allocation6], 256
    $region29: #{tpu_custom_call.1} parent=1 // pred_fallthru
      _
    // Predicated region
    $region30: #{tpu_custom_call.1} parent=1 // pred_check
      _
    $region31: #{tpu_custom_call.1} parent=1 // pred_check_branch
      %76 = sbr.rel (0) target = $region33
    $region32: #{tpu_custom_call.1} parent=1 // pred_region
      %78 = dma.done [#allocation6], 128
    $region33: #{tpu_custom_call.1} parent=1 // pred_fallthru
      _
    // Predicated region
    $region34: #{tpu_custom_call.1} parent=1 // pred_check
      _
    $region35: #{tpu_custom_call.1} parent=1 // pred_check_branch
      %80 = sbr.rel (0) target = $region37
    $region36: #{tpu_custom_call.1} parent=1 // pred_region
      %82 = dma.done [#allocation9], 256
    $region37: #{tpu_custom_call.1} parent=1 // pred_fallthru
      _
    %p83 = scmp.eq.s32.totalorder 0, 0
    // Predicated region
    $region38: #{tpu_custom_call.1} parent=1 // pred_check
      %p84 = pneg %p83
    $region39: #{tpu_custom_call.1} parent=1 // pred_check_branch
      %86 = sbr.rel (%p84) target = $region41
    $region40: #{tpu_custom_call.1} parent=1 // pred_region
      %vm87 = vcmask 261120
      %88 = vst.msk [vmem:[#allocation10] sm:$0xff] %vm87, 0.0
      %v89 = vld [vmem:[#allocation7] sm:$0xff]
      %v90 = vld [vmem:[#allocation8] sm:$0xff]
      %v91 = vld [vmem:[#allocation8 + $0x8] sm:$0xff]
      %v92 = vld [vmem:[%s4] sm:$0x1]
      %v94 = vperm.slane %v92, 0
      %vm96 = vcmask 130048
      %v98 = vsel %vm96, %v89, 0
      %100 = vmatpush.msra.mxu0 0.0
      %101 = vmatpush.msra.mxu0 0.0
      %102 = vmatpush.msra.mxu0 0.0
      %103 = vmatpush.msra.mxu0 0.0
      %104 = vmatpush.msra.mxu0 0.0
      %105 = vmatpush.msra.mxu0 0.0
      %106 = vmatpush.msra.mxu0 0.0
      %107 = vmatpush.msra.mxu0 0.0
      %108 = vmatpush.msra.mxu0 0.0
      %109 = vmatpush.msra.mxu0 0.0
      %110 = vmatpush.msra.mxu0 0.0
      %111 = vmatpush.msra.mxu0 0.0
      %112 = vmatpush.msra.mxu0 0.0
      %113 = vmatpush.msra.mxu0 0.0
      %114 = vmatpush.msra.mxu0 %v91
      %115 = vmatpush.msra.mxu0 %v90
      %116 = vmatmul.f32.gmra.mxu0 %v98
      %v117 = vpop.f32.mrf.mxu0
      %v118 = vadd.f32 %v94, %v117
      %119 = vdwg.mxu0
      %v120 = vmax.f32 %v118, 0.0
      %121 = vst.msk [vmem:[#allocation11] sm:$0xff] %vm87, %v120
    $region41: #{tpu_custom_call.1} parent=1 // pred_fallthru
      _
    %v122 = vld [vmem:[#allocation2] sm:$0x1]
    %v123 = vlaneseq
    %v124 = vshrl.u32 %v123, 7
    %v125 = vperm.slane %v122, 0
    %vm126 = vcmp.eq.s32.totalorder %v124, %v125
    %v127 = vld [vmem:[#allocation5] sm:$0xff]
    %v128 = vld [vmem:[#allocation5 + $0x8] sm:$0xff]
    %v129 = vsel %vm126, 1, 0
    %v130 = vcvt.s32.f32 %v129
    %v131 = vld [vmem:[#allocation10] sm:$0xff]
    %vm132 = vcmask 130048
    %v134 = vsel %vm132, %v130, 0
    %136 = vmatpush.msra.mxu0 0.0
    %137 = vmatpush.msra.mxu0 0.0
    %138 = vmatpush.msra.mxu0 0.0
    %139 = vmatpush.msra.mxu0 0.0
    %140 = vmatpush.msra.mxu0 0.0
    %141 = vmatpush.msra.mxu0 0.0
    %142 = vmatpush.msra.mxu0 0.0
    %143 = vmatpush.msra.mxu0 0.0
    %144 = vmatpush.msra.mxu0 0.0
    %145 = vmatpush.msra.mxu0 0.0
    %146 = vmatpush.msra.mxu0 0.0
    %147 = vmatpush.msra.mxu0 0.0
    %148 = vmatpush.msra.mxu0 0.0
    %149 = vmatpush.msra.mxu0 0.0
    %150 = vmatpush.msra.mxu0 %v128
    %151 = vmatpush.msra.mxu0 %v127
    %152 = vmatmul.f32.gmra.mxu0 %v134
    %v153 = vpop.f32.mrf.mxu0
    %v154 = vadd.f32 0.0, %v153
    %155 = vdwg.mxu0
    %v156 = vadd.f32 %v131, %v154
    %vm157 = vcmask 261120
    %158 = vst.msk [vmem:[#allocation10] sm:$0xff] %vm157, %v156
    // Predicated region
    $region42: #{tpu_custom_call.1} parent=1 // pred_check
      _
    $region43: #{tpu_custom_call.1} parent=1 // pred_check_branch
      %160 = sbr.rel (0) target = $region45
    $region44: #{tpu_custom_call.1} parent=1 // pred_region
      %162 = vsyncadd [#allocation4], 0
      %s164 = sshll.u32 [#allocation10], 4
      %s165 = int_to_ptr.vmem [resolvable:$true] %s164
      %s166 = sshll.u32 %s5, 4
      %s167 = int_to_ptr.hbm [resolvable:$true] %s166
      %169 = dma.vmem_to_hbm [thread:$0]  %s165, 128, %s167, [#allocation4]
    $region45: #{tpu_custom_call.1} parent=1 // pred_fallthru
      _
    // Predicated region
    $region46: #{tpu_custom_call.1} parent=1 // pred_check
      _
    $region47: #{tpu_custom_call.1} parent=1 // pred_check_branch
      %171 = sbr.rel (0) target = $region49
    $region48: #{tpu_custom_call.1} parent=1 // pred_region
      %173 = vsyncadd [#allocation12], 0
      %s175 = sshll.u32 [#allocation11], 4
      %s176 = int_to_ptr.vmem [resolvable:$true] %s175
      %s177 = sshll.u32 %s6, 4
      %s178 = int_to_ptr.hbm [resolvable:$true] %s177
      %180 = dma.vmem_to_hbm [thread:$0]  %s176, 128, %s178, [#allocation12]
    $region49: #{tpu_custom_call.1} parent=1 // pred_fallthru
      _
    // Predicated region
    $region50: #{tpu_custom_call.1} parent=1 // pred_check
      _
    $region51: #{tpu_custom_call.1} parent=1 // pred_check_branch
      %182 = sbr.rel (0) target = $region53
    $region52: #{tpu_custom_call.1} parent=1 // pred_region
      %184 = dma.done [#allocation4], 128
    $region53: #{tpu_custom_call.1} parent=1 // pred_fallthru
      _
    // Predicated region
    $region54: #{tpu_custom_call.1} parent=1 // pred_check
      _
    $region55: #{tpu_custom_call.1} parent=1 // pred_check_branch
      %186 = sbr.rel (0) target = $region57
    $region56: #{tpu_custom_call.1} parent=1 // pred_region
      %188 = dma.done [#allocation12], 128
    $region57: #{tpu_custom_call.1} parent=1 // pred_fallthru
      _
    %189 = vsyncpa [#allocation3], 1
    %190 = vsyncpa [#allocation6], 1
    %191 = vsyncpa [#allocation9], 1
    %192 = vsyncpa [#allocation4], 1
    %193 = vsyncpa [#allocation12], 1

</llo_original>
